<compile_context>
chip_gen: v5e
topology: v5e:2x2
jax: 0.10.0
libtpu: 0.0.40
codegen_flags: <defaults>
</compile_context>

<pallas_src>
import functools

import jax
import jax.numpy as jnp
from jax.experimental import pallas as pl
from jax.experimental.pallas import tpu as pltpu

_INV40 = 1.0 / 40.0  # the 1/40 position-decay constant from the module


# ---------------------------------------------------------------------------
# Kernels
# ---------------------------------------------------------------------------

def _ape_kernel_cols(pos_ref, x_ref, o_ref):
    """Path A: x block is (1, TS, H) with H on lanes.

    Weight is computed on a (1, TS, 1) column and broadcast over the lane
    axis by the multiply.
    """
    b = pl.program_id(0)
    s = pl.program_id(1)
    pos_start = pos_ref[b, 0]
    pos_end = pos_ref[b, 1]

    _, ts, _ = x_ref.shape
    # absolute token index j for each row of this sequence tile
    j = s * ts + jax.lax.broadcasted_iota(jnp.int32, (1, ts, 1), dimension=1)
    sel = jnp.where(j < pos_end, pos_end - j, j - pos_start)       # int32
    weight = 1.0 - sel.astype(jnp.float32) * _INV40                # (1, TS, 1)
    o_ref[...] = (x_ref[...] * weight).astype(o_ref.dtype)


def _ape_kernel_flat(pos_ref, x_ref, o_ref, *, hidden):
    """Path B (H < 128, H | 128): x reshaped to (B, S*H/128, 128).

    Lane-dense (128-wide) blocks -> unmasked vector stores. The token index
    of each element is row * (128 // H) + (lane >> log2(H)).
    """
    b = pl.program_id(0)
    r = pl.program_id(1)
    pos_start = pos_ref[b, 0]
    pos_end = pos_ref[b, 1]

    _, tr, lanes = x_ref.shape
    tok_per_row = lanes // hidden          # 128 // H (H is a power of two here)
    shift = hidden.bit_length() - 1        # log2(H)

    row = jax.lax.broadcasted_iota(jnp.int32, (1, tr, lanes), dimension=1)
    lane = jax.lax.broadcasted_iota(jnp.int32, (1, tr, lanes), dimension=2)
    tok = (r * tr + row) * tok_per_row + jnp.right_shift(lane, shift)
    sel = jnp.where(tok < pos_end, pos_end - tok, tok - pos_start)
    weight = 1.0 - sel.astype(jnp.float32) * _INV40
    o_ref[...] = (x_ref[...] * weight).astype(o_ref.dtype)


# ---------------------------------------------------------------------------
# Wrapper
# ---------------------------------------------------------------------------

def _pick_tile(total_rows, row_bytes, max_block_bytes):
    """Pick a row-tile: largest multiple of 8 dividing total_rows under the
    byte cap; fall back to the full dim when it already fits."""
    max_rows = max(8, max_block_bytes // max(1, row_bytes))
    if total_rows <= max_rows:
        return total_rows                    # full dim (always legal)
    start = (max_rows // 8) * 8
    for cand in range(start, 7, -8):
        if total_rows % cand == 0:
            return cand
    # No dividing tile: non-dividing multiple of 8 (Pallas masks the ragged edge).
    return max(8, start)


def absolute_position_embedding(x, pos_inx, *, max_block_bytes=2 * 1024 * 1024):
    """x: (B, S, H) float, pos_inx: (B, 2) int -> (B, S, H) float."""
    B, S, H = x.shape
    pos_inx = pos_inx.astype(jnp.int32)
    itemsize = jnp.dtype(x.dtype).itemsize

    cost = pl.CostEstimate(
        flops=3 * B * S * H,
        transcendentals=0,
        bytes_accessed=2 * B * S * H * itemsize + pos_inx.size * 4,
    )
    cparams = pltpu.CompilerParams(
        dimension_semantics=("parallel", "parallel"),
    )

    # Lane-dense path when H < 128, H divides 128 and S*H folds into 128-lanes.
    use_flat = (H < 128) and (128 % H == 0) and ((S * H) % 128 == 0)

    if use_flat:
        rows = (S * H) // 128
        x2 = x.reshape(B, rows, 128)
        tr = _pick_tile(rows, 128 * itemsize, max_block_bytes)
        grid = (B, pl.cdiv(rows, tr))
        grid_spec = pltpu.PrefetchScalarGridSpec(
            num_scalar_prefetch=1,
            grid=grid,
            in_specs=[pl.BlockSpec((1, tr, 128), lambda b, r, pos: (b, r, 0))],
            out_specs=pl.BlockSpec((1, tr, 128), lambda b, r, pos: (b, r, 0)),
        )
        out = pl.pallas_call(
            functools.partial(_ape_kernel_flat, hidden=H),
            out_shape=jax.ShapeDtypeStruct((B, rows, 128), x.dtype),
            grid_spec=grid_spec,
            compiler_params=cparams,
            cost_estimate=cost,
        )(pos_inx, x2)
        return out.reshape(B, S, H)

    # Default path: H on lanes, sequence axis tiled, column-broadcast weight.
    ts = _pick_tile(S, H * itemsize, max_block_bytes)
    grid = (B, pl.cdiv(S, ts))
    grid_spec = pltpu.PrefetchScalarGridSpec(
        num_scalar_prefetch=1,
        grid=grid,
        in_specs=[pl.BlockSpec((1, ts, H), lambda b, s, pos: (b, s, 0))],
        out_specs=pl.BlockSpec((1, ts, H), lambda b, s, pos: (b, s, 0)),
    )
    return pl.pallas_call(
        _ape_kernel_cols,
        out_shape=jax.ShapeDtypeStruct((B, S, H), x.dtype),
        grid_spec=grid_spec,
        compiler_params=cparams,
        cost_estimate=cost,
    )(pos_inx, x)


# ---------------------------------------------------------------------------
# Reference + tests
# ---------------------------------------------------------------------------

def _reference(x, pos_inx):
    S = x.shape[1]
    j = jnp.arange(S)[None, :]                       # (1, S)
    start = pos_inx[:, 0:1].astype(jnp.float32)      # (B, 1)
    end = pos_inx[:, 1:2].astype(jnp.float32)        # (B, 1)
    w = jnp.where(j < pos_inx[:, 1:2],
                  1.0 - (end - j) / 40.0,
                  1.0 - (j - start) / 40.0)
    return w[:, :, None] * x


def _check(x, pos_inx, **kwargs):
    out = jax.block_until_ready(absolute_position_embedding(x, pos_inx, **kwargs))
    ref = _reference(x, pos_inx)
    assert out.shape == x.shape
    assert jnp.allclose(out, ref, atol=1e-5, rtol=1e-5), (
        f"mismatch: max abs err {jnp.max(jnp.abs(out - ref))}")


if __name__ == "__main__":
    key = jax.random.PRNGKey(0)
    k1, k2, k3, k4 = jax.random.split(key, 4)

    # 1) Module-sized small case (H=32 < 128 -> lane-dense flattened path).
    x = jax.random.normal(k1, (2, 8, 32), dtype=jnp.float32)
    pos = jnp.array([[2, 5], [1, 3]], dtype=jnp.int32)
    _check(x, pos)

    # 2) H = 128 (column-broadcast path, H on lanes).
    x = jax.random.normal(k2, (2, 16, 128), dtype=jnp.float32)
    pos = jnp.array([[3, 7], [0, 12]], dtype=jnp.int32)
    _check(x, pos)

    # 3) Column-broadcast path with multiple sequence tiles per batch element
    #    (small block-byte cap to exercise the seq tiling at small shapes).
    x = jax.random.normal(k3, (2, 64, 128), dtype=jnp.float32)
    pos = jnp.array([[10, 20], [5, 50]], dtype=jnp.int32)
    _check(x, pos, max_block_bytes=16 * 1024)

    # 4) Flattened lane-dense path with multiple row tiles.
    x = jax.random.normal(k4, (2, 64, 32), dtype=jnp.float32)
    pos = jnp.array([[0, 8], [30, 40]], dtype=jnp.int32)
    _check(x, pos, max_block_bytes=4 * 1024)

    print("KERNEL_OK")
</pallas_src>

<mosaic_0001>
module attributes {stable_mosaic.version = 11 : i64} {
  func.func @_ape_kernel_flat(%arg0: i32, %arg1: i32, %arg2: memref<2x2xi32, #tpu.memory_space<smem>>, %arg3: memref<1x2x128xf32, #tpu.memory_space<vmem>>, %arg4: memref<1x2x128xf32, #tpu.memory_space<vmem>>) attributes {dimension_semantics = [#tpu.dimension_semantics<parallel>, #tpu.dimension_semantics<parallel>], iteration_bounds = array<i64: 2, 1>, scalar_prefetch = 1 : i64, scratch_operands = 0 : i64, tpu.core_type = #tpu.core_type<tc>, window_params = [{transform_indices = @transform_0, window_bounds = array<i64: 1, 2, 128>}, {transform_indices = @transform_1, window_bounds = array<i64: 1, 2, 128>}]} {
    %0 = arith.index_cast %arg0 : i32 to index
    %c0 = arith.constant 0 : index
    %1 = memref.load %arg2[%0, %c0] : memref<2x2xi32, #tpu.memory_space<smem>>
    %2 = arith.index_cast %arg0 : i32 to index
    %c1 = arith.constant 1 : index
    %3 = memref.load %arg2[%2, %c1] : memref<2x2xi32, #tpu.memory_space<smem>>
    %4 = tpu.iota {dimensions = array<i32: 1>} : vector<1x2x128xi32>
    %5 = tpu.iota {dimensions = array<i32: 2>} : vector<1x2x128xi32>
    %c2_i32 = arith.constant 2 : i32
    %6 = arith.muli %arg1, %c2_i32 : i32
    %7 = vector.broadcast %6 : i32 to vector<1x2x128xi32>
    %8 = arith.addi %7, %4 : vector<1x2x128xi32>
    %c4_i32 = arith.constant 4 : i32
    %9 = vector.broadcast %c4_i32 : i32 to vector<1x2x128xi32>
    %10 = arith.muli %8, %9 : vector<1x2x128xi32>
    %c5_i32 = arith.constant 5 : i32
    %11 = vector.broadcast %c5_i32 : i32 to vector<1x2x128xi32>
    %12 = arith.shrsi %5, %11 : vector<1x2x128xi32>
    %13 = arith.addi %10, %12 : vector<1x2x128xi32>
    %14 = vector.broadcast %3 : i32 to vector<1x2x128xi32>
    %15 = arith.cmpi slt, %13, %14 : vector<1x2x128xi32>
    %16 = vector.broadcast %3 : i32 to vector<1x2x128xi32>
    %17 = arith.subi %16, %13 : vector<1x2x128xi32>
    %18 = vector.broadcast %1 : i32 to vector<1x2x128xi32>
    %19 = arith.subi %13, %18 : vector<1x2x128xi32>
    %20 = arith.select %15, %17, %19 : vector<1x2x128xi1>, vector<1x2x128xi32>
    %21 = arith.sitofp %20 : vector<1x2x128xi32> to vector<1x2x128xf32>
    %cst = arith.constant 2.500000e-02 : f32
    %22 = vector.broadcast %cst : f32 to vector<1x2x128xf32>
    %23 = arith.mulf %21, %22 : vector<1x2x128xf32>
    %cst_0 = arith.constant 1.000000e+00 : f32
    %24 = vector.broadcast %cst_0 : f32 to vector<1x2x128xf32>
    %25 = arith.subf %24, %23 : vector<1x2x128xf32>
    %c0_1 = arith.constant 0 : index
    %c0_2 = arith.constant 0 : index
    %c0_3 = arith.constant 0 : index
    %26 = vector.load %arg3[%c0_1, %c0_2, %c0_3] : memref<1x2x128xf32, #tpu.memory_space<vmem>>, vector<1x2x128xf32>
    %27 = arith.mulf %26, %25 : vector<1x2x128xf32>
    %c0_4 = arith.constant 0 : index
    %c0_5 = arith.constant 0 : index
    %c0_6 = arith.constant 0 : index
    %28 = vector.load %arg4[%c0_4, %c0_5, %c0_6] : memref<1x2x128xf32, #tpu.memory_space<vmem>>, vector<1x2x128xf32>
    tpu.vector_store %arg4[%c0_4, %c0_5, %c0_6], %27 {strides = array<i32>} : memref<1x2x128xf32, #tpu.memory_space<vmem>>, vector<1x2x128xf32>,
    return
  }
  func.func @transform_0(%arg0: i32, %arg1: i32, %arg2: memref<2x2xi32, #tpu.memory_space<smem>>) -> (i32, i32, i32) {
    %c0_i32 = arith.constant 0 : i32
    %c0_i32_0 = arith.constant 0 : i32
    return %arg0, %arg1, %c0_i32 : i32, i32, i32
  }
  func.func @transform_1(%arg0: i32, %arg1: i32, %arg2: memref<2x2xi32, #tpu.memory_space<smem>>) -> (i32, i32, i32) {
    %c0_i32 = arith.constant 0 : i32
    %c0_i32_0 = arith.constant 0 : i32
    return %arg0, %arg1, %c0_i32 : i32, i32, i32
  }
}

</mosaic_0001>

<llo_original>
// kernel: tpu_custom_call.1
$region0: #{tpu_custom_call.1}
  #allocation0 [shape = 'u32[]', space=smem, size = 0x4, offset = 0x4, fixed_abs, tag = 'smem constant byte address 0x4 - core index']
  #allocation1 [shape = 'u32[72,128]{1,0:T(1,128)}', space=vmem, size = 0x9000, scoped, tag = 'internal scratch']
  #allocation2 [shape = 's32[1]{0}', space=sflag, size = 0x4, scoped, tag = 'scoped memory for tpu_custom_call.1']
  #allocation3 [shape = 'u8[1024]{0}', space=smem, size = 0x400, scoped, tag = 'prefetched SMEM operand 0']
  %s0 = inlined_call_operand.hbm [shape: s32[2,2], index: 0, kind: input, shape index: {}]
  %s1 = inlined_call_operand.hbm [shape: f32[2,2,128], index: 1, kind: input, shape index: {}]
  %s2 = inlined_call_operand.hbm [shape: f32[2,2,128], index: 2, kind: output, shape index: {}]
  %s3 = sld [smem:[#allocation0]]
  $region41: #{tpu_custom_call.1} parent=0
    _
  %s5 = ssub.s32 1, %s3
  %s6 = scalar_select 0, %s5, %s3
  %s8 = sshll.u32 %s0, 4
  %s9 = int_to_ptr.hbm [resolvable:$true] %s8
  %11 = dma.hbm_to_smem %s9, 32, [#allocation3], [#allocation2]
  %13 = dma.done [#allocation2], 32
  %14 = sfence
  $region1: #{tpu_custom_call.1} parent=0
    #allocation4 [shape = 'u8[2048]{0}', space=vmem, size = 0x800, scoped, tag = 'input window, operand 1']
    #allocation5 [shape = 's32[2]{0}', space=sflag, size = 0x8, scoped, tag = 'scoped memory for tpu_custom_call.1']
    #allocation6 [shape = 's32[2]{0}', space=sflag, size = 0x8, scoped, tag = 'scoped memory for tpu_custom_call.1']
    #allocation7 [shape = 'u8[2048]{0}', space=vmem, size = 0x800, scoped, tag = 'output window, operand 0']
    %15 = vsyncpa [#allocation5], 0
    %s16 = scalar_lea.sflag [#allocation5], 1
    %17 = vsyncpa %s16, 0
    %18 = vsyncpa [#allocation6], 0
    %s19 = scalar_lea.sflag [#allocation6], 1
    %20 = vsyncpa %s19, 0
    loop: start=0, step=1, limit=4
    $region2: #{tpu_custom_call.1} parent=1 // loop_pre_header
      _
    $region3: #{tpu_custom_call.1} parent=1 // loop_header
      %s22 = sphi 0, %s26
      %p23 = scmp.ge.s32.totalorder %s22, 4
      %s29 = sphi 0, %s41
      %s30 = sphi 0, %s37
      %s31 = sphi 0, %s29
      %s32 = sphi 0, %s30
      %s33 = sphi 0, %s31
      %s34 = sphi 0, %s32
      %s46 = sphi 0, %s48
      %s49 = sphi 0, %s46
      %s50 = sphi 0, %s49
      %s66 = sphi 0, %s50
      %s74 = sphi 0, %s76
      %s77 = sphi 0, %s74
      %s78 = sphi 0, %s77
      %s94 = sphi 0, %s78
    $region4: #{tpu_custom_call.1} parent=1 // loop_header_branch
      %25 = sbr.rel (%p23) target = $region8
    $region5: #{tpu_custom_call.1} parent=1 // loop_body
      %s27 = ssub.s32 %s22, 1
      %s28 = ssub.s32 %s22, 2
      %s35 = sadd.s32 1, %s30
      %p36 = scmp.ge.s32.totalorder %s35, 1
      %s37 = scalar_select %p36, 0, %s35
      %s38 = sadd.s32 1, %s29
      %s39 = scalar_select %p36, %s38, %s29
      %p40 = scmp.ge.s32.totalorder %s39, 2
      %s41 = scalar_select %p40, 0, %s39
      %s42 = ssub.s32 %s29, %s41
      %s43 = ssub.s32 %s30, %s37
      %s44 = sor.u32 %s42, %s43
      %p45 = scmp.eq.s32.totalorder %s44, 0
      %s47 = sadd.s32 %s46, 1
      %s48 = scalar_select %p45, %s46, %s47
      %p51 = pneg %p45
      %p52 = scmp.eq.s32.totalorder %s22, 1
      %p53 = por %p51, %p52
      %p54 = scmp.ne.s32.totalorder %s46, %s49
      %p55 = scmp.eq.s32.totalorder %s22, 0
      %p56 = por %p54, %p55
      %p57 = scmp.ne.s32.totalorder %s46, %s49
      %p58 = scmp.eq.s32.totalorder %s27, 1
      %p59 = por %p57, %p58
      %p60 = scmp.ne.s32.totalorder %s49, %s50
      %p61 = scmp.eq.s32.totalorder %s27, 0
      %p62 = por %p60, %p61
      %p63 = scmp.ne.s32.totalorder %s49, %s50
      %p64 = scmp.eq.s32.totalorder %s28, 1
      %p65 = por %p63, %p64
      %p67 = scmp.ne.s32.totalorder %s50, %s66
      %p68 = scmp.eq.s32.totalorder %s28, 0
      %p69 = por %p67, %p68
      %s70 = ssub.s32 %s29, %s41
      %s71 = ssub.s32 %s30, %s37
      %s72 = sor.u32 %s70, %s71
      %p73 = scmp.eq.s32.totalorder %s72, 0
      %s75 = sadd.s32 %s74, 1
      %s76 = scalar_select %p73, %s74, %s75
      %p79 = pneg %p73
      %p80 = scmp.eq.s32.totalorder %s22, 1
      %p81 = por %p79, %p80
      %p82 = scmp.ne.s32.totalorder %s74, %s77
      %p83 = scmp.eq.s32.totalorder %s22, 0
      %p84 = por %p82, %p83
      %p85 = scmp.ne.s32.totalorder %s74, %s77
      %p86 = scmp.eq.s32.totalorder %s27, 1
      %p87 = por %p85, %p86
      %p88 = scmp.ne.s32.totalorder %s77, %s78
      %p89 = scmp.eq.s32.totalorder %s27, 0
      %p90 = por %p88, %p89
      %p91 = scmp.ne.s32.totalorder %s77, %s78
      %p92 = scmp.eq.s32.totalorder %s28, 1
      %p93 = por %p91, %p92
      %p95 = scmp.ne.s32.totalorder %s78, %s94
      %p96 = scmp.eq.s32.totalorder %s28, 0
      %p97 = por %p95, %p96
      %p98 = scmp.le.s32.totalorder 1, %s22
      %p99 = scmp.lt.s32.totalorder %s22, 3
      %p100 = pnand %p98, %p99
      %p101 = pneg %p100
      // Predicated region
      $region9: #{tpu_custom_call.1} parent=5 // pred_check
        _
      $region10: #{tpu_custom_call.1} parent=5 // pred_check_branch
        %103 = sbr.rel (%p100) target = $region12
      $region11: #{tpu_custom_call.1} parent=5 // pred_region
        %s104 = ssub.s32 %s22, 1
      $region12: #{tpu_custom_call.1} parent=5 // pred_fallthru
        _
      %p105 = scmp.lt.s32.totalorder %s22, 2
      // Predicated region
      $region13: #{tpu_custom_call.1} parent=5 // pred_check
        %p106 = pneg %p105
      $region14: #{tpu_custom_call.1} parent=5 // pred_check_branch
        %108 = sbr.rel (%p106) target = $region16
      $region15: #{tpu_custom_call.1} parent=5 // pred_region
        // Predicated region
        $region17: #{tpu_custom_call.1} parent=15 // pred_check
          %p109 = pneg %p56
        $region18: #{tpu_custom_call.1} parent=15 // pred_check_branch
          %111 = sbr.rel (%p109) target = $region20
        $region19: #{tpu_custom_call.1} parent=15 // pred_region
          %s112 = sand.u32 %s46, 1
          %s113 = scalar_lea.sflag [#allocation5], %s112
          %s114 = sand.u32 %s46, 1
          %s115 = smul.addr %s114, 2
          %s116 = scalar_lea.vmem [#allocation4], %s115
          %118 = vsyncadd %s113, 0
          %s119 = sadd.s32 %s30, %s29
          %s120 = smul.addr %s119, 2
          %s121 = scalar_lea.hbm %s1, %s120
          %s123 = sshll.u32 %s121, 4
          %s124 = int_to_ptr.hbm [resolvable:$true] %s123
          %s125 = sshll.u32 %s116, 4
          %s126 = int_to_ptr.vmem [resolvable:$true] %s125
          %128 = dma.hbm_to_vmem [thread:$0]  %s124, 32, %s126, %s113
        $region20: #{tpu_custom_call.1} parent=15 // pred_fallthru
          _
      $region16: #{tpu_custom_call.1} parent=5 // pred_fallthru
        _
      %p129 = scmp.le.s32.totalorder 1, %s22
      %p130 = scmp.lt.s32.totalorder %s22, 3
      %p131 = pnand %p129, %p130
      %p132 = pneg %p131
      // Predicated region
      $region21: #{tpu_custom_call.1} parent=5 // pred_check
        _
      $region22: #{tpu_custom_call.1} parent=5 // pred_check_branch
        %134 = sbr.rel (%p131) target = $region24
      $region23: #{tpu_custom_call.1} parent=5 // pred_region
        %s135 = ssub.s32 %s22, 1
        %s136 = sand.u32 %s49, 1
        %s137 = scalar_lea.sflag [#allocation5], %s136
        %s138 = sand.u32 %s49, 1
        %s139 = smul.addr %s138, 2
        %s140 = scalar_lea.vmem [#allocation4], %s139
        // Predicated region
        $region25: #{tpu_custom_call.1} parent=23 // pred_check
          %p141 = pneg %p62
        $region26: #{tpu_custom_call.1} parent=23 // pred_check_branch
          %143 = sbr.rel (%p141) target = $region28
        $region27: #{tpu_custom_call.1} parent=23 // pred_region
          %145 = dma.done %s137, 32
        $region28: #{tpu_custom_call.1} parent=23 // pred_fallthru
          _
        %s146 = sand.u32 %s49, 1
        %s147 = scalar_lea.sflag [#allocation5], %s146
        %s148 = sand.u32 %s49, 1
        %s149 = smul.addr %s148, 2
        %s150 = scalar_lea.vmem [#allocation4], %s149
        %p151 = pneg %p62
        %p152 = pneg %p59
        %p153 = pneg %p90
        %p154 = pneg %p87
        %s155 = sand.u32 %s77, 1
        %s156 = scalar_lea.sflag [#allocation6], %s155
        %s157 = sand.u32 %s77, 1
        %s158 = smul.addr %s157, 2
        %s159 = scalar_lea.vmem [#allocation7], %s158
        %s160 = smul.u32 %s31, 128
        %s161 = sld [smem:[#allocation3 + %s160]]
        %s162 = sadd.s32 %s160, 1
        %s163 = sld [smem:[#allocation3 + %s162]]
        %v164 = vlaneseq
        %v165 = vshrl.u32 %v164, 7
        %v166 = vlaneseq
        %v167 = vand.u32 %v166, 127
        %s168 = smul.u32 %s32, 2
        %v169 = vstv %s168
        %v170 = vadd.s32 %v169, %v165
        %v171 = vmul.u32 %v170, 4
        %v172 = vshra.s32 %v167, 5
        %v173 = vadd.s32 %v171, %v172
        %v174 = vstv %s163
        %vm175 = vcmp.lt.s32.totalorder %v173, %v174
        %v176 = vsub.s32 %v174, %v173
        %v177 = vstv %s161
        %v178 = vsub.s32 %v173, %v177
        %v179 = vsel %vm175, %v176, %v178
        %v180 = vcvt.s32.f32 %v179
        %v181 = vmul.f32 %v180, 0.025
        %v182 = vsub.f32 1.0, %v181
        %v183 = vld [vmem:[%s140] sm:$0x3]
        %v184 = vmul.f32 %v183, %v182
        %185 = vst [vmem:[%s159] sm:$0x3] %v184
        %s186 = sand.u32 %s77, 1
        %s187 = scalar_lea.sflag [#allocation6], %s186
        %s188 = sand.u32 %s77, 1
        %s189 = smul.addr %s188, 2
        %s190 = scalar_lea.vmem [#allocation7], %s189
        // Predicated region
        $region29: #{tpu_custom_call.1} parent=23 // pred_check
          %p191 = pneg %p87
        $region30: #{tpu_custom_call.1} parent=23 // pred_check_branch
          %193 = sbr.rel (%p191) target = $region32
        $region31: #{tpu_custom_call.1} parent=23 // pred_region
          %195 = vsyncadd %s187, 0
          %s196 = sadd.s32 %s32, %s31
          %s197 = smul.addr %s196, 2
          %s198 = scalar_lea.hbm %s2, %s197
          %s200 = sshll.u32 %s190, 4
          %s201 = int_to_ptr.vmem [resolvable:$true] %s200
          %s202 = sshll.u32 %s198, 4
          %s203 = int_to_ptr.hbm [resolvable:$true] %s202
          %205 = dma.vmem_to_hbm [thread:$0]  %s201, 32, %s203, %s187
        $region32: #{tpu_custom_call.1} parent=23 // pred_fallthru
          _
      $region24: #{tpu_custom_call.1} parent=5 // pred_fallthru
        _
      %p206 = scmp.le.s32.totalorder 2, %s22
      // Predicated region
      $region33: #{tpu_custom_call.1} parent=5 // pred_check
        %p207 = pneg %p206
      $region34: #{tpu_custom_call.1} parent=5 // pred_check_branch
        %209 = sbr.rel (%p207) target = $region36
      $region35: #{tpu_custom_call.1} parent=5 // pred_region
        %s210 = ssub.s32 %s22, 2
        // Predicated region
        $region37: #{tpu_custom_call.1} parent=35 // pred_check
          %p211 = pneg %p93
        $region38: #{tpu_custom_call.1} parent=35 // pred_check_branch
          %213 = sbr.rel (%p211) target = $region40
        $region39: #{tpu_custom_call.1} parent=35 // pred_region
          %s214 = sand.u32 %s78, 1
          %s215 = scalar_lea.sflag [#allocation6], %s214
          %s216 = sand.u32 %s78, 1
          %s217 = smul.addr %s216, 2
          %s218 = scalar_lea.vmem [#allocation7], %s217
          %220 = dma.done %s215, 32
        $region40: #{tpu_custom_call.1} parent=35 // pred_fallthru
          _
      $region36: #{tpu_custom_call.1} parent=5 // pred_fallthru
        _
    $region6: #{tpu_custom_call.1} parent=1 // loop_footer
      %s26 = sadd.s32 1, %s22
    $region7: #{tpu_custom_call.1} parent=1 // loop_footer_branch
      %21 = sbr.rel target = $region3
    $region8: #{tpu_custom_call.1} parent=1 // loop_exit
      _
    %221 = vsyncpa [#allocation5], 1
    %s222 = scalar_lea.sflag [#allocation5], 1
    %223 = vsyncpa %s222, 1
    %224 = vsyncpa [#allocation6], 1
    %s225 = scalar_lea.sflag [#allocation6], 1
    %226 = vsyncpa %s225, 1

</llo_original>
